<compile_context>
chip_gen: v7x
topology: tpu7x:2x2x1
jax: 0.10.0
libtpu: 0.0.40
codegen_flags: <defaults>
</compile_context>

<pallas_src>
import math
import jax
import jax.numpy as jnp
from jax.experimental import pallas as pl
from jax.experimental.pallas import tpu as pltpu

_VMEM_LIMIT = 32 * 1024 * 1024


def _patch_merging_kernel(x_ref, g_ref, b_ref, w_ref, o_ref):
    """Fused 2x2 gather + 4C concat + LayerNorm(f32) + bf16 reduction matmul.

    x_ref : (1, TR, 2, W2, 2C) f32   rows of the (B, H/2, 2, W/2, 2C) view of x
                                     (h = 2*h2 + r, last dim packs [col even | col odd])
    g_ref : (1, 4C) f32              LayerNorm gamma
    b_ref : (1, 4C) f32              LayerNorm beta
    w_ref : (4C, 2C) bf16            reduction weight (Linear, bias=False)
    o_ref : (1, TR*W2, 2C) f32       output tile
    """
    c2 = x_ref.shape[-1]
    c = c2 // 2
    even = x_ref[0, :, 0, :, :]          # (TR, W2, 2C): [x0 | x2] per output col
    odd = x_ref[0, :, 1, :, :]           # (TR, W2, 2C): [x1 | x3] per output col
    # Reference concat order: [x0, x1, x2, x3]  (lane-aligned slices & concat).
    xc = jnp.concatenate(
        [even[..., :c], odd[..., :c], even[..., c:], odd[..., c:]], axis=-1)
    tr, w2, c4 = xc.shape
    xc = xc.reshape(tr * w2, c4).astype(jnp.float32)

    # LayerNorm(4C) in f32 (eps matches nn.LayerNorm default).
    mu = jnp.mean(xc, axis=-1, keepdims=True)
    var = jnp.mean(jnp.square(xc - mu), axis=-1, keepdims=True)
    y = (xc - mu) * jax.lax.rsqrt(var + 1e-5)
    y = y * g_ref[...] + b_ref[...]

    # Reduction matmul on the MXU: bf16 inputs, f32 accumulation.
    o_ref[0] = jnp.dot(y.astype(jnp.bfloat16), w_ref[...],
                       preferred_element_type=jnp.float32)


def patch_merging(x_seq, h, w, params, row_tile=None):
    """x_seq: (B, H*W, C) f32  ->  (B, (H/2)*(W/2), 2C) f32."""
    b, l, c = x_seq.shape
    assert l == h * w, "input feature has wrong size"
    assert h % 2 == 0 and w % 2 == 0, "H/W must be even"
    h2, w2 = h // 2, w // 2

    if row_tile is None:
        # Prefer >=2 row blocks (pipelining, v7x dual-TC) with 8-aligned tiles.
        row_tile = h2
        for cand in (h2 // 2, h2 // 4):
            if cand and h2 % cand == 0 and (cand * w2) % 8 == 0:
                row_tile = cand
                break
    assert h2 % row_tile == 0

    # Free (metadata-only) view: (B, H/2, 2, W/2, 2C).  The trailing 2C packs
    # [even-col channels | odd-col channels]; no data movement happens here.
    x5 = x_seq.reshape(b, h2, 2, w2, 2 * c)

    gamma = params["gamma"].reshape(1, 4 * c).astype(jnp.float32)
    beta = params["beta"].reshape(1, 4 * c).astype(jnp.float32)
    w_bf16 = params["w"].astype(jnp.bfloat16)            # (4C, 2C)

    m_out = h2 * w2
    tile_m = row_tile * w2
    grid = (b, h2 // row_tile)

    cost = pl.CostEstimate(
        flops=2 * b * m_out * (4 * c) * (2 * c),
        transcendentals=b * m_out,
        bytes_accessed=(x_seq.size * 4 + w_bf16.size * 2
                        + (gamma.size + beta.size) * 4
                        + b * m_out * 2 * c * 4),
    )

    out = pl.pallas_call(
        _patch_merging_kernel,
        out_shape=jax.ShapeDtypeStruct((b, m_out, 2 * c), jnp.float32),
        grid=grid,
        in_specs=[
            pl.BlockSpec((1, row_tile, 2, w2, 2 * c),
                         lambda bi, i: (bi, i, 0, 0, 0)),
            pl.BlockSpec((1, 4 * c), lambda bi, i: (0, 0)),
            pl.BlockSpec((1, 4 * c), lambda bi, i: (0, 0)),
            pl.BlockSpec((4 * c, 2 * c), lambda bi, i: (0, 0)),
        ],
        out_specs=pl.BlockSpec((1, tile_m, 2 * c), lambda bi, i: (bi, i, 0)),
        compiler_params=pltpu.CompilerParams(
            dimension_semantics=("parallel", "parallel"),
            vmem_limit_bytes=_VMEM_LIMIT),
        cost_estimate=cost,
    )(x5, gamma, beta, w_bf16)
    return out


def patch_merging_ref(x_seq, h, w, params):
    """Pure-JAX reference matching the PyTorch module (f32 everywhere)."""
    b, l, c = x_seq.shape
    x = x_seq.reshape(b, h, w, c)
    x0 = x[:, 0::2, 0::2, :]
    x1 = x[:, 1::2, 0::2, :]
    x2 = x[:, 0::2, 1::2, :]
    x3 = x[:, 1::2, 1::2, :]
    xc = jnp.concatenate([x0, x1, x2, x3], axis=-1).reshape(b, -1, 4 * c)
    mu = jnp.mean(xc, axis=-1, keepdims=True)
    var = jnp.mean(jnp.square(xc - mu), axis=-1, keepdims=True)
    y = (xc - mu) * jax.lax.rsqrt(var + 1e-5)
    y = y * params["gamma"] + params["beta"]
    return jnp.einsum("blk,kn->bln", y, params["w"])


if __name__ == "__main__":
    key = jax.random.PRNGKey(0)
    k1, k2, k3, k4 = jax.random.split(key, 4)

    # Small shapes consistent with the module (network uses dim=128 at 52x52;
    # here H=W=16, dim=128 so 4C=512 / 2C=256 stay lane-dense).
    B, H, W, C = 2, 16, 16, 128
    x = jax.random.normal(k1, (B, H * W, C), jnp.float32)
    params = {
        "gamma": 1.0 + 0.1 * jax.random.normal(k2, (4 * C,), jnp.float32),
        "beta": 0.1 * jax.random.normal(k3, (4 * C,), jnp.float32),
        "w": jax.random.normal(k4, (4 * C, 2 * C), jnp.float32) / math.sqrt(4 * C),
    }

    fwd = jax.jit(lambda xx, pp: patch_merging(xx, H, W, pp))
    out = fwd(x, params)
    jax.block_until_ready(out)
    assert out.shape == (B, (H // 2) * (W // 2), 2 * C), out.shape

    # Correctness vs f32 reference (difference is only the bf16 matmul inputs).
    ref = patch_merging_ref(x, H, W, params)
    err = float(jnp.max(jnp.abs(out - ref)))
    assert err < 1e-1, f"max |err| = {err}"

    print("KERNEL_OK")
</pallas_src>

<mosaic_0001>
module attributes {stable_mosaic.version = 11 : i64} {
  func.func @_patch_merging_kernel(%arg0: i32, %arg1: i32, %arg2: memref<1x4x2x8x256xf32, #tpu.memory_space<vmem>>, %arg3: memref<1x512xf32, #tpu.memory_space<vmem>>, %arg4: memref<1x512xf32, #tpu.memory_space<vmem>>, %arg5: memref<512x256xbf16, #tpu.memory_space<vmem>>, %arg6: memref<1x32x256xf32, #tpu.memory_space<vmem>>) attributes {dimension_semantics = [#tpu.dimension_semantics<parallel>, #tpu.dimension_semantics<parallel>], iteration_bounds = array<i64: 2, 2>, scalar_prefetch = 0 : i64, scratch_operands = 0 : i64, tpu.core_type = #tpu.core_type<tc>, window_params = [{transform_indices = @transform_0, window_bounds = array<i64: 1, 4, 2, 8, 256>}, {pipeline_mode = #tpu.pipeline_mode<synchronous>, transform_indices = @transform_1, window_bounds = array<i64: 1, 512>}, {pipeline_mode = #tpu.pipeline_mode<synchronous>, transform_indices = @transform_2, window_bounds = array<i64: 1, 512>}, {pipeline_mode = #tpu.pipeline_mode<synchronous>, transform_indices = @transform_3, window_bounds = array<i64: 512, 256>}, {transform_indices = @transform_4, window_bounds = array<i64: 1, 32, 256>}]} {
    %c0 = arith.constant 0 : index
    %c0_0 = arith.constant 0 : index
    %c0_1 = arith.constant 0 : index
    %c0_2 = arith.constant 0 : index
    %c0_3 = arith.constant 0 : index
    %0 = vector.load %arg2[%c0, %c0_0, %c0_1, %c0_2, %c0_3] : memref<1x4x2x8x256xf32, #tpu.memory_space<vmem>>, vector<1x4x1x8x256xf32>
    %1 = vector.shape_cast %0 : vector<1x4x1x8x256xf32> to vector<4x8x256xf32>
    %c0_4 = arith.constant 0 : index
    %c0_5 = arith.constant 0 : index
    %c1 = arith.constant 1 : index
    %c0_6 = arith.constant 0 : index
    %c0_7 = arith.constant 0 : index
    %2 = vector.load %arg2[%c0_4, %c0_5, %c1, %c0_6, %c0_7] : memref<1x4x2x8x256xf32, #tpu.memory_space<vmem>>, vector<1x4x1x8x256xf32>
    %3 = vector.shape_cast %2 : vector<1x4x1x8x256xf32> to vector<4x8x256xf32>
    %4 = vector.extract_strided_slice %1 {offsets = [0, 0, 0], sizes = [4, 8, 128], strides = [1, 1, 1]} : vector<4x8x256xf32> to vector<4x8x128xf32>
    %5 = vector.extract_strided_slice %3 {offsets = [0, 0, 0], sizes = [4, 8, 128], strides = [1, 1, 1]} : vector<4x8x256xf32> to vector<4x8x128xf32>
    %6 = vector.extract_strided_slice %1 {offsets = [0, 0, 128], sizes = [4, 8, 128], strides = [1, 1, 1]} : vector<4x8x256xf32> to vector<4x8x128xf32>
    %7 = vector.extract_strided_slice %3 {offsets = [0, 0, 128], sizes = [4, 8, 128], strides = [1, 1, 1]} : vector<4x8x256xf32> to vector<4x8x128xf32>
    %8 = tpu.concatenate %4, %5, %6, %7 in 2 : vector<4x8x128xf32>, vector<4x8x128xf32>, vector<4x8x128xf32>, vector<4x8x128xf32> -> vector<4x8x512xf32>
    %9 = vector.shape_cast %8 : vector<4x8x512xf32> to vector<32x512xf32>
    %cst = arith.constant dense<0.000000e+00> : vector<32xf32>
    %10 = vector.multi_reduction <add>, %9, %cst [1] : vector<32x512xf32> to vector<32xf32>
    %11 = vector.shape_cast %10 : vector<32xf32> to vector<32x1xf32>
    %cst_8 = arith.constant 5.120000e+02 : f32
    %12 = vector.broadcast %cst_8 : f32 to vector<32x1xf32>
    %13 = arith.divf %11, %12 : vector<32x1xf32>
    %14 = vector.broadcast %13 : vector<32x1xf32> to vector<32x512xf32>
    %15 = arith.subf %9, %14 : vector<32x512xf32>
    %16 = arith.mulf %15, %15 : vector<32x512xf32>
    %cst_9 = arith.constant dense<0.000000e+00> : vector<32xf32>
    %17 = vector.multi_reduction <add>, %16, %cst_9 [1] : vector<32x512xf32> to vector<32xf32>
    %18 = vector.shape_cast %17 : vector<32xf32> to vector<32x1xf32>
    %cst_10 = arith.constant 5.120000e+02 : f32
    %19 = vector.broadcast %cst_10 : f32 to vector<32x1xf32>
    %20 = arith.divf %18, %19 : vector<32x1xf32>
    %21 = vector.broadcast %13 : vector<32x1xf32> to vector<32x512xf32>
    %22 = arith.subf %9, %21 : vector<32x512xf32>
    %cst_11 = arith.constant 9.99999974E-6 : f32
    %23 = vector.broadcast %cst_11 : f32 to vector<32x1xf32>
    %24 = arith.addf %20, %23 : vector<32x1xf32>
    %25 = math.rsqrt %24 : vector<32x1xf32>
    %26 = vector.broadcast %25 : vector<32x1xf32> to vector<32x512xf32>
    %27 = arith.mulf %22, %26 : vector<32x512xf32>
    %c0_12 = arith.constant 0 : index
    %c0_13 = arith.constant 0 : index
    %28 = vector.load %arg3[%c0_12, %c0_13] : memref<1x512xf32, #tpu.memory_space<vmem>>, vector<1x512xf32>
    %29 = vector.broadcast %28 : vector<1x512xf32> to vector<32x512xf32>
    %30 = arith.mulf %27, %29 : vector<32x512xf32>
    %c0_14 = arith.constant 0 : index
    %c0_15 = arith.constant 0 : index
    %31 = vector.load %arg4[%c0_14, %c0_15] : memref<1x512xf32, #tpu.memory_space<vmem>>, vector<1x512xf32>
    %32 = vector.broadcast %31 : vector<1x512xf32> to vector<32x512xf32>
    %33 = arith.addf %30, %32 : vector<32x512xf32>
    %34 = arith.truncf %33 : vector<32x512xf32> to vector<32x512xbf16>
    %c0_16 = arith.constant 0 : index
    %c0_17 = arith.constant 0 : index
    %35 = vector.load %arg5[%c0_16, %c0_17] : memref<512x256xbf16, #tpu.memory_space<vmem>>, vector<512x256xbf16>
    %cst_18 = arith.constant dense<0.000000e+00> : vector<32x256xf32>
    %36 = tpu.matmul %34, %35, %cst_18 {dimension_numbers = #tpu.dot_dimension_numbers<[1], [0], [0], [1], [0, 0, 1, 1], [], []>} : vector<32x512xbf16>, vector<512x256xbf16>, vector<32x256xf32> -> vector<32x256xf32>
    %c0_19 = arith.constant 0 : index
    %c0_20 = arith.constant 0 : index
    %c0_21 = arith.constant 0 : index
    %37 = vector.load %arg6[%c0_19, %c0_20, %c0_21] : memref<1x32x256xf32, #tpu.memory_space<vmem>>, vector<1x32x256xf32>
    %38 = vector.shape_cast %37 : vector<1x32x256xf32> to vector<32x256xf32>
    %39 = vector.shape_cast %36 : vector<32x256xf32> to vector<1x32x256xf32>
    tpu.vector_store %arg6[%c0_19, %c0_20, %c0_21], %39 {strides = array<i32>} : memref<1x32x256xf32, #tpu.memory_space<vmem>>, vector<1x32x256xf32>,
    return
  }
  func.func @transform_0(%arg0: i32, %arg1: i32) -> (i32, i32, i32, i32, i32) {
    %c0_i32 = arith.constant 0 : i32
    %c0_i32_0 = arith.constant 0 : i32
    %c0_i32_1 = arith.constant 0 : i32
    %c0_i32_2 = arith.constant 0 : i32
    return %arg0, %arg1, %c0_i32, %c0_i32_0, %c0_i32_1 : i32, i32, i32, i32, i32
  }
  func.func @transform_1(%arg0: i32, %arg1: i32) -> (i32, i32) {
    %c0_i32 = arith.constant 0 : i32
    %c0_i32_0 = arith.constant 0 : i32
    %c0_i32_1 = arith.constant 0 : i32
    return %c0_i32, %c0_i32_0 : i32, i32
  }
  func.func @transform_2(%arg0: i32, %arg1: i32) -> (i32, i32) {
    %c0_i32 = arith.constant 0 : i32
    %c0_i32_0 = arith.constant 0 : i32
    %c0_i32_1 = arith.constant 0 : i32
    return %c0_i32, %c0_i32_0 : i32, i32
  }
  func.func @transform_3(%arg0: i32, %arg1: i32) -> (i32, i32) {
    %c0_i32 = arith.constant 0 : i32
    %c0_i32_0 = arith.constant 0 : i32
    %c0_i32_1 = arith.constant 0 : i32
    return %c0_i32, %c0_i32_0 : i32, i32
  }
  func.func @transform_4(%arg0: i32, %arg1: i32) -> (i32, i32, i32) {
    %c0_i32 = arith.constant 0 : i32
    %c0_i32_0 = arith.constant 0 : i32
    return %arg0, %arg1, %c0_i32 : i32, i32, i32
  }
}

</mosaic_0001>

<llo_original>
// kernel: _lambda_.1
$region0: #{_lambda_.1}
  #allocation0 [shape = 'u32[]', space=smem, size = 0x4, offset = 0x4, fixed_abs, tag = 'smem constant byte address 0x4 - core index']
  #allocation1 [shape = 'u32[144,128]{1,0:T(1,128)}', space=vmem, size = 0x12000, scoped, tag = 'internal scratch']
  %s0 = inlined_call_operand.vmem [shape: f32[2,8,2,8,256], index: 0, kind: input, shape index: {}]
  %s1 = inlined_call_operand.vmem [shape: f32[1,512], index: 1, kind: input, shape index: {}]
  %s2 = inlined_call_operand.vmem [shape: f32[1,512], index: 2, kind: input, shape index: {}]
  %s3 = inlined_call_operand.vmem [shape: bf16[512,256], index: 3, kind: input, shape index: {}]
  %s4 = inlined_call_operand.hbm [shape: f32[2,64,256], index: 4, kind: output, shape index: {}]
  %s5 = sld [smem:[#allocation0]]
  $region49: #{_lambda_.1} parent=0
    _
  %s7 = ssub.s32 1, %s5
  %s8 = scalar_select 0, %s7, %s5
  $region1: #{_lambda_.1} parent=0
    #allocation2 [shape = 'u8[65536]{0}', space=vmem, size = 0x10000, scoped, tag = 'output window, operand 0']
    #allocation3 [shape = 's32[2]{0}', space=sflag, size = 0x8, scoped, tag = 'scoped memory for _lambda_.1']
    %9 = vsyncpa [#allocation3], 0
    %s10 = scalar_lea.sflag [#allocation3], 1
    %11 = vsyncpa %s10, 0
    loop: start=0, step=1, limit=6
    $region2: #{_lambda_.1} parent=1 // loop_pre_header
      _
    $region3: #{_lambda_.1} parent=1 // loop_header
      %s13 = sphi 0, %s17
      %p14 = scmp.ge.s32.totalorder %s13, 6
      %s20 = sphi 0, %s32
      %s21 = sphi 0, %s28
      %s22 = sphi 0, %s20
      %s23 = sphi 0, %s21
      %s24 = sphi 0, %s22
      %s25 = sphi 0, %s23
      %s37 = sphi 0, %s39
      %s40 = sphi 0, %s37
      %s41 = sphi 0, %s40
      %s57 = sphi 0, %s41
      %s61 = sphi 0, %s61
      %s63 = sphi 0, %s61
      %s64 = sphi 0, %s63
      %s78 = sphi 0, %s64
      %s82 = sphi 0, %s82
      %s84 = sphi 0, %s82
      %s85 = sphi 0, %s84
      %s99 = sphi 0, %s85
      %s103 = sphi 0, %s103
      %s105 = sphi 0, %s103
      %s106 = sphi 0, %s105
      %s120 = sphi 0, %s106
      %s128 = sphi 0, %s130
      %s131 = sphi 0, %s128
      %s132 = sphi 0, %s131
      %s148 = sphi 0, %s132
    $region4: #{_lambda_.1} parent=1 // loop_header_branch
      %16 = sbr.rel (%p14) target = $region8
    $region5: #{_lambda_.1} parent=1 // loop_body
      %s18 = ssub.s32 %s13, 1
      %s19 = ssub.s32 %s13, 2
      %s26 = sadd.s32 1, %s21
      %p27 = scmp.ge.s32.totalorder %s26, 2
      %s28 = scalar_select %p27, 0, %s26
      %s29 = sadd.s32 1, %s20
      %s30 = scalar_select %p27, %s29, %s20
      %p31 = scmp.ge.s32.totalorder %s30, 2
      %s32 = scalar_select %p31, 0, %s30
      %s33 = ssub.s32 %s20, %s32
      %s34 = ssub.s32 %s21, %s28
      %s35 = sor.u32 %s33, %s34
      %p36 = scmp.eq.s32.totalorder %s35, 0
      %s38 = sadd.s32 %s37, 1
      %s39 = scalar_select %p36, %s37, %s38
      %p42 = pneg %p36
      %p43 = scmp.eq.s32.totalorder %s13, 3
      %p44 = por %p42, %p43
      %p45 = scmp.ne.s32.totalorder %s37, %s40
      %p46 = scmp.eq.s32.totalorder %s13, 0
      %p47 = por %p45, %p46
      %p48 = scmp.ne.s32.totalorder %s37, %s40
      %p49 = scmp.eq.s32.totalorder %s18, 3
      %p50 = por %p48, %p49
      %p51 = scmp.ne.s32.totalorder %s40, %s41
      %p52 = scmp.eq.s32.totalorder %s18, 0
      %p53 = por %p51, %p52
      %p54 = scmp.ne.s32.totalorder %s40, %s41
      %p55 = scmp.eq.s32.totalorder %s19, 3
      %p56 = por %p54, %p55
      %p58 = scmp.ne.s32.totalorder %s41, %s57
      %p59 = scmp.eq.s32.totalorder %s19, 0
      %p60 = por %p58, %p59
      %s62 = sadd.s32 %s61, 1
      %p65 = scmp.eq.s32.totalorder %s13, 3
      %p66 = scmp.ne.s32.totalorder %s61, %s63
      %p67 = scmp.eq.s32.totalorder %s13, 0
      %p68 = por %p66, %p67
      %p69 = scmp.ne.s32.totalorder %s61, %s63
      %p70 = scmp.eq.s32.totalorder %s18, 3
      %p71 = por %p69, %p70
      %p72 = scmp.ne.s32.totalorder %s63, %s64
      %p73 = scmp.eq.s32.totalorder %s18, 0
      %p74 = por %p72, %p73
      %p75 = scmp.ne.s32.totalorder %s63, %s64
      %p76 = scmp.eq.s32.totalorder %s19, 3
      %p77 = por %p75, %p76
      %p79 = scmp.ne.s32.totalorder %s64, %s78
      %p80 = scmp.eq.s32.totalorder %s19, 0
      %p81 = por %p79, %p80
      %s83 = sadd.s32 %s82, 1
      %p86 = scmp.eq.s32.totalorder %s13, 3
      %p87 = scmp.ne.s32.totalorder %s82, %s84
      %p88 = scmp.eq.s32.totalorder %s13, 0
      %p89 = por %p87, %p88
      %p90 = scmp.ne.s32.totalorder %s82, %s84
      %p91 = scmp.eq.s32.totalorder %s18, 3
      %p92 = por %p90, %p91
      %p93 = scmp.ne.s32.totalorder %s84, %s85
      %p94 = scmp.eq.s32.totalorder %s18, 0
      %p95 = por %p93, %p94
      %p96 = scmp.ne.s32.totalorder %s84, %s85
      %p97 = scmp.eq.s32.totalorder %s19, 3
      %p98 = por %p96, %p97
      %p100 = scmp.ne.s32.totalorder %s85, %s99
      %p101 = scmp.eq.s32.totalorder %s19, 0
      %p102 = por %p100, %p101
      %s104 = sadd.s32 %s103, 1
      %p107 = scmp.eq.s32.totalorder %s13, 3
      %p108 = scmp.ne.s32.totalorder %s103, %s105
      %p109 = scmp.eq.s32.totalorder %s13, 0
      %p110 = por %p108, %p109
      %p111 = scmp.ne.s32.totalorder %s103, %s105
      %p112 = scmp.eq.s32.totalorder %s18, 3
      %p113 = por %p111, %p112
      %p114 = scmp.ne.s32.totalorder %s105, %s106
      %p115 = scmp.eq.s32.totalorder %s18, 0
      %p116 = por %p114, %p115
      %p117 = scmp.ne.s32.totalorder %s105, %s106
      %p118 = scmp.eq.s32.totalorder %s19, 3
      %p119 = por %p117, %p118
      %p121 = scmp.ne.s32.totalorder %s106, %s120
      %p122 = scmp.eq.s32.totalorder %s19, 0
      %p123 = por %p121, %p122
      %s124 = ssub.s32 %s20, %s32
      %s125 = ssub.s32 %s21, %s28
      %s126 = sor.u32 %s124, %s125
      %p127 = scmp.eq.s32.totalorder %s126, 0
      %s129 = sadd.s32 %s128, 1
      %s130 = scalar_select %p127, %s128, %s129
      %p133 = pneg %p127
      %p134 = scmp.eq.s32.totalorder %s13, 3
      %p135 = por %p133, %p134
      %p136 = scmp.ne.s32.totalorder %s128, %s131
      %p137 = scmp.eq.s32.totalorder %s13, 0
      %p138 = por %p136, %p137
      %p139 = scmp.ne.s32.totalorder %s128, %s131
      %p140 = scmp.eq.s32.totalorder %s18, 3
      %p141 = por %p139, %p140
      %p142 = scmp.ne.s32.totalorder %s131, %s132
      %p143 = scmp.eq.s32.totalorder %s18, 0
      %p144 = por %p142, %p143
      %p145 = scmp.ne.s32.totalorder %s131, %s132
      %p146 = scmp.eq.s32.totalorder %s19, 3
      %p147 = por %p145, %p146
      %p149 = scmp.ne.s32.totalorder %s132, %s148
      %p150 = scmp.eq.s32.totalorder %s19, 0
      %p151 = por %p149, %p150
      %p152 = scmp.le.s32.totalorder 1, %s13
      %p153 = scmp.lt.s32.totalorder %s13, 5
      %p154 = pnand %p152, %p153
      %p155 = pneg %p154
      // Predicated region
      $region9: #{_lambda_.1} parent=5 // pred_check
        _
      $region10: #{_lambda_.1} parent=5 // pred_check_branch
        %157 = sbr.rel (%p154) target = $region12
      $region11: #{_lambda_.1} parent=5 // pred_region
        %s158 = ssub.s32 %s13, 1
        // Predicated region
        $region13: #{_lambda_.1} parent=11 // pred_check
          %p159 = pneg %p74
        $region14: #{_lambda_.1} parent=11 // pred_check_branch
          %161 = sbr.rel (%p159) target = $region16
        $region15: #{_lambda_.1} parent=11 // pred_region
          _
        $region16: #{_lambda_.1} parent=11 // pred_fallthru
          _
        // Predicated region
        $region17: #{_lambda_.1} parent=11 // pred_check
          %p162 = pneg %p95
        $region18: #{_lambda_.1} parent=11 // pred_check_branch
          %164 = sbr.rel (%p162) target = $region20
        $region19: #{_lambda_.1} parent=11 // pred_region
          _
        $region20: #{_lambda_.1} parent=11 // pred_fallthru
          _
        // Predicated region
        $region21: #{_lambda_.1} parent=11 // pred_check
          %p165 = pneg %p116
        $region22: #{_lambda_.1} parent=11 // pred_check_branch
          %167 = sbr.rel (%p165) target = $region24
        $region23: #{_lambda_.1} parent=11 // pred_region
          _
        $region24: #{_lambda_.1} parent=11 // pred_fallthru
          _
      $region12: #{_lambda_.1} parent=5 // pred_fallthru
        _
      %p168 = scmp.lt.s32.totalorder %s13, 4
      // Predicated region
      $region25: #{_lambda_.1} parent=5 // pred_check
        %p169 = pneg %p168
      $region26: #{_lambda_.1} parent=5 // pred_check_branch
        %171 = sbr.rel (%p169) target = $region28
      $region27: #{_lambda_.1} parent=5 // pred_region
        // Predicated region
        $region29: #{_lambda_.1} parent=27 // pred_check
          %p172 = pneg %p47
        $region30: #{_lambda_.1} parent=27 // pred_check_branch
          %174 = sbr.rel (%p172) target = $region32
        $region31: #{_lambda_.1} parent=27 // pred_region
          %s175 = smul.u32 4, %s21
          %p176 = scmp.lt.s32.totalorder %s20, 1
          %s177 = scalar_select %p176, %s20, 1
          %p178 = scmp.lt.s32.totalorder %s175, 7
          %s179 = scalar_select %p178, %s175, 7
          %s180 = smul.addr %s179, 4
          %s181 = smul.addr %s177, 32
          %s182 = sadd.s32 %s180, %s181
          %s183 = smul.addr %s182, 8
          %s184 = scalar_lea.vmem %s0, %s183
          %s185 = smul.u32 4, %s21
        $region32: #{_lambda_.1} parent=27 // pred_fallthru
          _
      $region28: #{_lambda_.1} parent=5 // pred_fallthru
        _
      %p186 = scmp.le.s32.totalorder 1, %s13
      %p187 = scmp.lt.s32.totalorder %s13, 5
      %p188 = pnand %p186, %p187
      %p189 = pneg %p188
      // Predicated region
      $region33: #{_lambda_.1} parent=5 // pred_check
        _
      $region34: #{_lambda_.1} parent=5 // pred_check_branch
        %191 = sbr.rel (%p188) target = $region36
      $region35: #{_lambda_.1} parent=5 // pred_region
        %s192 = ssub.s32 %s13, 1
        %s193 = smul.u32 4, %s23
        %p194 = scmp.lt.s32.totalorder %s22, 1
        %s195 = scalar_select %p194, %s22, 1
        %p196 = scmp.lt.s32.totalorder %s193, 7
        %s197 = scalar_select %p196, %s193, 7
        %s198 = smul.addr %s197, 4
        %s199 = smul.addr %s195, 32
        %s200 = sadd.s32 %s198, %s199
        %s201 = smul.addr %s200, 8
        %s202 = scalar_lea.vmem %s0, %s201
        %p203 = pneg %p53
        %p204 = pneg %p50
        %p205 = pneg %p74
        %p206 = pneg %p71
        %p207 = pneg %p95
        %p208 = pneg %p92
        %p209 = pneg %p116
        %p210 = pneg %p113
        %p211 = pneg %p144
        %p212 = pneg %p141
        %s213 = sand.u32 %s131, 1
        %s214 = scalar_lea.sflag [#allocation3], %s213
        %s215 = sand.u32 %s131, 1
        %s216 = smul.addr %s215, 64
        %s217 = scalar_lea.vmem [#allocation2], %s216
        %s218 = smul.u32 4, %s23
        %p219 = scmp.lt.s32.totalorder %s22, 1
        %s220 = scalar_select %p219, %s22, 1
        %p221 = scmp.lt.s32.totalorder %s218, 7
        %s222 = scalar_select %p221, %s218, 7
        %s223 = smul.addr %s222, 4
        %s224 = smul.addr %s220, 32
        %s225 = sadd.s32 %s223, %s224
        %s226 = smul.addr %s225, 8
        %s227 = scalar_lea.vmem %s0, %s226
        %s228 = smul.u32 4, %s23
        %s229 = smul.u32 4, %s23
        %v230 = vld [vmem:[%s227] sm:$0xff]
        %v231 = vld [vmem:[%s227 + $0x8] sm:$0xff]
        %v232 = vld [vmem:[%s227 + $0x20] sm:$0xff]
        %v233 = vld [vmem:[%s227 + $0x28] sm:$0xff]
        %v234 = vld [vmem:[%s227 + $0x40] sm:$0xff]
        %v235 = vld [vmem:[%s227 + $0x48] sm:$0xff]
        %v236 = vld [vmem:[%s227 + $0x60] sm:$0xff]
        %v237 = vld [vmem:[%s227 + $0x68] sm:$0xff]
        %s238 = scalar_lea.vmem %s227, 16
        %v239 = vld [vmem:[%s238] sm:$0xff]
        %v240 = vld [vmem:[%s238 + $0x8] sm:$0xff]
        %v241 = vld [vmem:[%s238 + $0x20] sm:$0xff]
        %v242 = vld [vmem:[%s238 + $0x28] sm:$0xff]
        %v243 = vld [vmem:[%s238 + $0x40] sm:$0xff]
        %v244 = vld [vmem:[%s238 + $0x48] sm:$0xff]
        %v245 = vld [vmem:[%s238 + $0x60] sm:$0xff]
        %v246 = vld [vmem:[%s238 + $0x68] sm:$0xff]
        %v247 = vadd.f32 %v230, %v239
        %v248 = vadd.f32 %v247, %v231
        %v249 = vadd.f32 %v248, %v240
        %250 = vadd.xlane.f32.xlu0 %v249
        %v251 = vpop.xlane.xlu0 %250
        %v252 = vadd.f32 %v232, %v241
        %v253 = vadd.f32 %v252, %v233
        %v254 = vadd.f32 %v253, %v242
        %255 = vadd.xlane.f32.xlu0 %v254
        %v256 = vpop.xlane.xlu0 %255
        %v257 = vadd.f32 %v234, %v243
        %v258 = vadd.f32 %v257, %v235
        %v259 = vadd.f32 %v258, %v244
        %260 = vadd.xlane.f32.xlu0 %v259
        %v261 = vpop.xlane.xlu0 %260
        %v262 = vadd.f32 %v236, %v245
        %v263 = vadd.f32 %v262, %v237
        %v264 = vadd.f32 %v263, %v246
        %265 = vadd.xlane.f32.xlu0 %v264
        %v266 = vpop.xlane.xlu0 %265
        %v267 = vrcp.pop 512.0
        %v268 = vmul.f32 %v251, %v267
        %v269 = vmul.f32 %v256, %v267
        %v270 = vmul.f32 %v261, %v267
        %v271 = vmul.f32 %v266, %v267
        %v272 = vsub.f32 %v230, %v268
        %v273 = vsub.f32 %v239, %v268
        %v274 = vsub.f32 %v231, %v268
        %v275 = vsub.f32 %v240, %v268
        %v276 = vsub.f32 %v232, %v269
        %v277 = vsub.f32 %v241, %v269
        %v278 = vsub.f32 %v233, %v269
        %v279 = vsub.f32 %v242, %v269
        %v280 = vsub.f32 %v234, %v270
        %v281 = vsub.f32 %v243, %v270
        %v282 = vsub.f32 %v235, %v270
        %v283 = vsub.f32 %v244, %v270
        %v284 = vsub.f32 %v236, %v271
        %v285 = vsub.f32 %v245, %v271
        %v286 = vsub.f32 %v237, %v271
        %v287 = vsub.f32 %v246, %v271
        %v288 = vmul.f32 %v272, %v272
        %v289 = vmul.f32 %v273, %v273
        %v290 = vmul.f32 %v274, %v274
        %v291 = vmul.f32 %v275, %v275
        %v292 = vmul.f32 %v276, %v276
        %v293 = vmul.f32 %v277, %v277
        %v294 = vmul.f32 %v278, %v278
        %v295 = vmul.f32 %v279, %v279
        %v296 = vmul.f32 %v280, %v280
        %v297 = vmul.f32 %v281, %v281
        %v298 = vmul.f32 %v282, %v282
        %v299 = vmul.f32 %v283, %v283
        %v300 = vmul.f32 %v284, %v284
        %v301 = vmul.f32 %v285, %v285
        %v302 = vmul.f32 %v286, %v286
        %v303 = vmul.f32 %v287, %v287
        %v304 = vadd.f32 %v288, %v289
        %v305 = vadd.f32 %v304, %v290
        %v306 = vadd.f32 %v305, %v291
        %307 = vadd.xlane.f32.xlu0 %v306
        %v308 = vpop.xlane.xlu0 %307
        %v309 = vadd.f32 %v292, %v293
        %v310 = vadd.f32 %v309, %v294
        %v311 = vadd.f32 %v310, %v295
        %312 = vadd.xlane.f32.xlu0 %v311
        %v313 = vpop.xlane.xlu0 %312
        %v314 = vadd.f32 %v296, %v297
        %v315 = vadd.f32 %v314, %v298
        %v316 = vadd.f32 %v315, %v299
        %317 = vadd.xlane.f32.xlu0 %v316
        %v318 = vpop.xlane.xlu0 %317
        %v319 = vadd.f32 %v300, %v301
        %v320 = vadd.f32 %v319, %v302
        %v321 = vadd.f32 %v320, %v303
        %322 = vadd.xlane.f32.xlu0 %v321
        %v323 = vpop.xlane.xlu0 %322
        %v324 = vmul.f32 %v308, %v267
        %v325 = vmul.f32 %v313, %v267
        %v326 = vmul.f32 %v318, %v267
        %v327 = vmul.f32 %v323, %v267
        %v328 = vadd.f32 %v324, 1e-05
        %v329 = vadd.f32 %v325, 1e-05
        %v330 = vadd.f32 %v326, 1e-05
        %v331 = vadd.f32 %v327, 1e-05
        %v332 = vrsqrt.pop %v328
        %v333 = vrsqrt.pop %v329
        %v334 = vrsqrt.pop %v330
        %v335 = vrsqrt.pop %v331
        %v336 = vmul.f32 %v272, %v332
        %v337 = vmul.f32 %v273, %v332
        %v338 = vmul.f32 %v274, %v332
        %v339 = vmul.f32 %v275, %v332
        %v340 = vmul.f32 %v276, %v333
        %v341 = vmul.f32 %v277, %v333
        %v342 = vmul.f32 %v278, %v333
        %v343 = vmul.f32 %v279, %v333
        %v344 = vmul.f32 %v280, %v334
        %v345 = vmul.f32 %v281, %v334
        %v346 = vmul.f32 %v282, %v334
        %v347 = vmul.f32 %v283, %v334
        %v348 = vmul.f32 %v284, %v335
        %v349 = vmul.f32 %v285, %v335
        %v350 = vmul.f32 %v286, %v335
        %v351 = vmul.f32 %v287, %v335
        %v352 = vld [vmem:[%s1] sm:$0xf]
        %v354 = vlaneseq
        %v355 = vshrl.u32 %v354, 7
        %v356 = vsub.s32 0, %v355
        %v357 = vrot.slane %v352, %v356
        %v358 = vlaneseq
        %v359 = vshrl.u32 %v358, 7
        %v360 = vsub.s32 1, %v359
        %v361 = vrot.slane %v352, %v360
        %v362 = vlaneseq
        %v363 = vshrl.u32 %v362, 7
        %v364 = vsub.s32 2, %v363
        %v365 = vrot.slane %v352, %v364
        %v366 = vlaneseq
        %v367 = vshrl.u32 %v366, 7
        %v368 = vsub.s32 3, %v367
        %v369 = vrot.slane %v352, %v368
        %v374 = vmul.f32 %v336, %v357
        %v375 = vmul.f32 %v337, %v361
        %v376 = vmul.f32 %v338, %v365
        %v377 = vmul.f32 %v339, %v369
        %v378 = vmul.f32 %v340, %v357
        %v379 = vmul.f32 %v341, %v361
        %v380 = vmul.f32 %v342, %v365
        %v381 = vmul.f32 %v343, %v369
        %v382 = vmul.f32 %v344, %v357
        %v383 = vmul.f32 %v345, %v361
        %v384 = vmul.f32 %v346, %v365
        %v385 = vmul.f32 %v347, %v369
        %v386 = vmul.f32 %v348, %v357
        %v387 = vmul.f32 %v349, %v361
        %v388 = vmul.f32 %v350, %v365
        %v389 = vmul.f32 %v351, %v369
        %v390 = vld [vmem:[%s2] sm:$0xf]
        %v392 = vlaneseq
        %v393 = vshrl.u32 %v392, 7
        %v394 = vsub.s32 0, %v393
        %v395 = vrot.slane %v390, %v394
        %v396 = vlaneseq
        %v397 = vshrl.u32 %v396, 7
        %v398 = vsub.s32 1, %v397
        %v399 = vrot.slane %v390, %v398
        %v400 = vlaneseq
        %v401 = vshrl.u32 %v400, 7
        %v402 = vsub.s32 2, %v401
        %v403 = vrot.slane %v390, %v402
        %v404 = vlaneseq
        %v405 = vshrl.u32 %v404, 7
        %v406 = vsub.s32 3, %v405
        %v407 = vrot.slane %v390, %v406
        %v412 = vadd.f32 %v374, %v395
        %v413 = vadd.f32 %v375, %v399
        %v414 = vadd.f32 %v376, %v403
        %v415 = vadd.f32 %v377, %v407
        %v416 = vadd.f32 %v378, %v395
        %v417 = vadd.f32 %v379, %v399
        %v418 = vadd.f32 %v380, %v403
        %v419 = vadd.f32 %v381, %v407
        %v420 = vadd.f32 %v382, %v395
        %v421 = vadd.f32 %v383, %v399
        %v422 = vadd.f32 %v384, %v403
        %v423 = vadd.f32 %v385, %v407
        %v424 = vadd.f32 %v386, %v395
        %v425 = vadd.f32 %v387, %v399
        %v426 = vadd.f32 %v388, %v403
        %v427 = vadd.f32 %v389, %v407
        %v428 = vpack.c.bf16 %v416, %v412
        %v429 = vpack.c.bf16 %v417, %v413
        %v430 = vpack.c.bf16 %v418, %v414
        %v431 = vpack.c.bf16 %v419, %v415
        %v432 = vpack.c.bf16 %v424, %v420
        %v433 = vpack.c.bf16 %v425, %v421
        %v434 = vpack.c.bf16 %v426, %v422
        %v435 = vpack.c.bf16 %v427, %v423
        %v436 = vld [vmem:[%s3] sm:$0xff]
        %v437 = vld [vmem:[%s3 + $0x8] sm:$0xff]
        %v438 = vld [vmem:[%s3 + $0x10] sm:$0xff]
        %v439 = vld [vmem:[%s3 + $0x18] sm:$0xff]
        %v440 = vld [vmem:[%s3 + $0x20] sm:$0xff]
        %v441 = vld [vmem:[%s3 + $0x28] sm:$0xff]
        %v442 = vld [vmem:[%s3 + $0x30] sm:$0xff]
        %v443 = vld [vmem:[%s3 + $0x38] sm:$0xff]
        %v444 = vld [vmem:[%s3 + $0x40] sm:$0xff]
        %v445 = vld [vmem:[%s3 + $0x48] sm:$0xff]
        %v446 = vld [vmem:[%s3 + $0x50] sm:$0xff]
        %v447 = vld [vmem:[%s3 + $0x58] sm:$0xff]
        %v448 = vld [vmem:[%s3 + $0x60] sm:$0xff]
        %v449 = vld [vmem:[%s3 + $0x68] sm:$0xff]
        %v450 = vld [vmem:[%s3 + $0x70] sm:$0xff]
        %v451 = vld [vmem:[%s3 + $0x78] sm:$0xff]
        %v452 = vld [vmem:[%s3 + $0x80] sm:$0xff]
        %v453 = vld [vmem:[%s3 + $0x88] sm:$0xff]
        %v454 = vld [vmem:[%s3 + $0x90] sm:$0xff]
        %v455 = vld [vmem:[%s3 + $0x98] sm:$0xff]
        %v456 = vld [vmem:[%s3 + $0xa0] sm:$0xff]
        %v457 = vld [vmem:[%s3 + $0xa8] sm:$0xff]
        %v458 = vld [vmem:[%s3 + $0xb0] sm:$0xff]
        %v459 = vld [vmem:[%s3 + $0xb8] sm:$0xff]
        %v460 = vld [vmem:[%s3 + $0xc0] sm:$0xff]
        %v461 = vld [vmem:[%s3 + $0xc8] sm:$0xff]
        %v462 = vld [vmem:[%s3 + $0xd0] sm:$0xff]
        %v463 = vld [vmem:[%s3 + $0xd8] sm:$0xff]
        %v464 = vld [vmem:[%s3 + $0xe0] sm:$0xff]
        %v465 = vld [vmem:[%s3 + $0xe8] sm:$0xff]
        %v466 = vld [vmem:[%s3 + $0xf0] sm:$0xff]
        %v467 = vld [vmem:[%s3 + $0xf8] sm:$0xff]
        %v468 = vld [vmem:[%s3 + $0x100] sm:$0xff]
        %v469 = vld [vmem:[%s3 + $0x108] sm:$0xff]
        %v470 = vld [vmem:[%s3 + $0x110] sm:$0xff]
        %v471 = vld [vmem:[%s3 + $0x118] sm:$0xff]
        %v472 = vld [vmem:[%s3 + $0x120] sm:$0xff]
        %v473 = vld [vmem:[%s3 + $0x128] sm:$0xff]
        %v474 = vld [vmem:[%s3 + $0x130] sm:$0xff]
        %v475 = vld [vmem:[%s3 + $0x138] sm:$0xff]
        %v476 = vld [vmem:[%s3 + $0x140] sm:$0xff]
        %v477 = vld [vmem:[%s3 + $0x148] sm:$0xff]
        %v478 = vld [vmem:[%s3 + $0x150] sm:$0xff]
        %v479 = vld [vmem:[%s3 + $0x158] sm:$0xff]
        %v480 = vld [vmem:[%s3 + $0x160] sm:$0xff]
        %v481 = vld [vmem:[%s3 + $0x168] sm:$0xff]
        %v482 = vld [vmem:[%s3 + $0x170] sm:$0xff]
        %v483 = vld [vmem:[%s3 + $0x178] sm:$0xff]
        %v484 = vld [vmem:[%s3 + $0x180] sm:$0xff]
        %v485 = vld [vmem:[%s3 + $0x188] sm:$0xff]
        %v486 = vld [vmem:[%s3 + $0x190] sm:$0xff]
        %v487 = vld [vmem:[%s3 + $0x198] sm:$0xff]
        %v488 = vld [vmem:[%s3 + $0x1a0] sm:$0xff]
        %v489 = vld [vmem:[%s3 + $0x1a8] sm:$0xff]
        %v490 = vld [vmem:[%s3 + $0x1b0] sm:$0xff]
        %v491 = vld [vmem:[%s3 + $0x1b8] sm:$0xff]
        %v492 = vld [vmem:[%s3 + $0x1c0] sm:$0xff]
        %v493 = vld [vmem:[%s3 + $0x1c8] sm:$0xff]
        %v494 = vld [vmem:[%s3 + $0x1d0] sm:$0xff]
        %v495 = vld [vmem:[%s3 + $0x1d8] sm:$0xff]
        %v496 = vld [vmem:[%s3 + $0x1e0] sm:$0xff]
        %v497 = vld [vmem:[%s3 + $0x1e8] sm:$0xff]
        %v498 = vld [vmem:[%s3 + $0x1f0] sm:$0xff]
        %v499 = vld [vmem:[%s3 + $0x1f8] sm:$0xff]
        %v564 = vunpack.c.l.b16 %v436
        %v565 = vunpack.c.h.b16 %v436
        %v566 = vunpack.c.l.b16 %v437
        %v567 = vunpack.c.h.b16 %v437
        %v568 = vunpack.c.l.b16 %v438
        %v569 = vunpack.c.h.b16 %v438
        %v570 = vunpack.c.l.b16 %v439
        %v571 = vunpack.c.h.b16 %v439
        %v572 = vunpack.c.l.b16 %v440
        %v573 = vunpack.c.h.b16 %v440
        %v574 = vunpack.c.l.b16 %v441
        %v575 = vunpack.c.h.b16 %v441
        %v576 = vunpack.c.l.b16 %v442
        %v577 = vunpack.c.h.b16 %v442
        %v578 = vunpack.c.l.b16 %v443
        %v579 = vunpack.c.h.b16 %v443
        %v580 = vunpack.c.l.b16 %v444
        %v581 = vunpack.c.h.b16 %v444
        %v582 = vunpack.c.l.b16 %v445
        %v583 = vunpack.c.h.b16 %v445
        %v584 = vunpack.c.l.b16 %v446
        %v585 = vunpack.c.h.b16 %v446
        %v586 = vunpack.c.l.b16 %v447
        %v587 = vunpack.c.h.b16 %v447
        %v588 = vunpack.c.l.b16 %v448
        %v589 = vunpack.c.h.b16 %v448
        %v590 = vunpack.c.l.b16 %v449
        %v591 = vunpack.c.h.b16 %v449
        %v592 = vunpack.c.l.b16 %v450
        %v593 = vunpack.c.h.b16 %v450
        %v594 = vunpack.c.l.b16 %v451
        %v595 = vunpack.c.h.b16 %v451
        %v596 = vunpack.c.l.b16 %v452
        %v597 = vunpack.c.h.b16 %v452
        %v598 = vunpack.c.l.b16 %v453
        %v599 = vunpack.c.h.b16 %v453
        %v600 = vunpack.c.l.b16 %v454
        %v601 = vunpack.c.h.b16 %v454
        %v602 = vunpack.c.l.b16 %v455
        %v603 = vunpack.c.h.b16 %v455
        %v604 = vunpack.c.l.b16 %v456
        %v605 = vunpack.c.h.b16 %v456
        %v606 = vunpack.c.l.b16 %v457
        %v607 = vunpack.c.h.b16 %v457
        %v608 = vunpack.c.l.b16 %v458
        %v609 = vunpack.c.h.b16 %v458
        %v610 = vunpack.c.l.b16 %v459
        %v611 = vunpack.c.h.b16 %v459
        %v612 = vunpack.c.l.b16 %v460
        %v613 = vunpack.c.h.b16 %v460
        %v614 = vunpack.c.l.b16 %v461
        %v615 = vunpack.c.h.b16 %v461
        %v616 = vunpack.c.l.b16 %v462
        %v617 = vunpack.c.h.b16 %v462
        %v618 = vunpack.c.l.b16 %v463
        %v619 = vunpack.c.h.b16 %v463
        %v620 = vunpack.c.l.b16 %v464
        %v621 = vunpack.c.h.b16 %v464
        %v622 = vunpack.c.l.b16 %v465
        %v623 = vunpack.c.h.b16 %v465
        %v624 = vunpack.c.l.b16 %v466
        %v625 = vunpack.c.h.b16 %v466
        %v626 = vunpack.c.l.b16 %v467
        %v627 = vunpack.c.h.b16 %v467
        %v628 = vunpack.c.l.b16 %v468
        %v629 = vunpack.c.h.b16 %v468
        %v630 = vunpack.c.l.b16 %v469
        %v631 = vunpack.c.h.b16 %v469
        %v632 = vunpack.c.l.b16 %v470
        %v633 = vunpack.c.h.b16 %v470
        %v634 = vunpack.c.l.b16 %v471
        %v635 = vunpack.c.h.b16 %v471
        %v636 = vunpack.c.l.b16 %v472
        %v637 = vunpack.c.h.b16 %v472
        %v638 = vunpack.c.l.b16 %v473
        %v639 = vunpack.c.h.b16 %v473
        %v640 = vunpack.c.l.b16 %v474
        %v641 = vunpack.c.h.b16 %v474
        %v642 = vunpack.c.l.b16 %v475
        %v643 = vunpack.c.h.b16 %v475
        %v644 = vunpack.c.l.b16 %v476
        %v645 = vunpack.c.h.b16 %v476
        %v646 = vunpack.c.l.b16 %v477
        %v647 = vunpack.c.h.b16 %v477
        %v648 = vunpack.c.l.b16 %v478
        %v649 = vunpack.c.h.b16 %v478
        %v650 = vunpack.c.l.b16 %v479
        %v651 = vunpack.c.h.b16 %v479
        %v652 = vunpack.c.l.b16 %v480
        %v653 = vunpack.c.h.b16 %v480
        %v654 = vunpack.c.l.b16 %v481
        %v655 = vunpack.c.h.b16 %v481
        %v656 = vunpack.c.l.b16 %v482
        %v657 = vunpack.c.h.b16 %v482
        %v658 = vunpack.c.l.b16 %v483
        %v659 = vunpack.c.h.b16 %v483
        %v660 = vunpack.c.l.b16 %v484
        %v661 = vunpack.c.h.b16 %v484
        %v662 = vunpack.c.l.b16 %v485
        %v663 = vunpack.c.h.b16 %v485
        %v664 = vunpack.c.l.b16 %v486
        %v665 = vunpack.c.h.b16 %v486
        %v666 = vunpack.c.l.b16 %v487
        %v667 = vunpack.c.h.b16 %v487
        %v668 = vunpack.c.l.b16 %v488
        %v669 = vunpack.c.h.b16 %v488
        %v670 = vunpack.c.l.b16 %v489
        %v671 = vunpack.c.h.b16 %v489
        %v672 = vunpack.c.l.b16 %v490
        %v673 = vunpack.c.h.b16 %v490
        %v674 = vunpack.c.l.b16 %v491
        %v675 = vunpack.c.h.b16 %v491
        %v676 = vunpack.c.l.b16 %v492
        %v677 = vunpack.c.h.b16 %v492
        %v678 = vunpack.c.l.b16 %v493
        %v679 = vunpack.c.h.b16 %v493
        %v680 = vunpack.c.l.b16 %v494
        %v681 = vunpack.c.h.b16 %v494
        %v682 = vunpack.c.l.b16 %v495
        %v683 = vunpack.c.h.b16 %v495
        %v684 = vunpack.c.l.b16 %v496
        %v685 = vunpack.c.h.b16 %v496
        %v686 = vunpack.c.l.b16 %v497
        %v687 = vunpack.c.h.b16 %v497
        %v688 = vunpack.c.l.b16 %v498
        %v689 = vunpack.c.h.b16 %v498
        %v690 = vunpack.c.l.b16 %v499
        %v691 = vunpack.c.h.b16 %v499
        %v692 = vpack.c.b16 %v566, %v564
        %v693 = vpack.c.b16 %v567, %v565
        %v694 = vpack.c.b16 %v570, %v568
        %v695 = vpack.c.b16 %v571, %v569
        %v696 = vpack.c.b16 %v574, %v572
        %v697 = vpack.c.b16 %v575, %v573
        %v698 = vpack.c.b16 %v578, %v576
        %v699 = vpack.c.b16 %v579, %v577
        %v700 = vpack.c.b16 %v582, %v580
        %v701 = vpack.c.b16 %v583, %v581
        %v702 = vpack.c.b16 %v586, %v584
        %v703 = vpack.c.b16 %v587, %v585
        %v704 = vpack.c.b16 %v590, %v588
        %v705 = vpack.c.b16 %v591, %v589
        %v706 = vpack.c.b16 %v594, %v592
        %v707 = vpack.c.b16 %v595, %v593
        %v708 = vpack.c.b16 %v598, %v596
        %v709 = vpack.c.b16 %v599, %v597
        %v710 = vpack.c.b16 %v602, %v600
        %v711 = vpack.c.b16 %v603, %v601
        %v712 = vpack.c.b16 %v606, %v604
        %v713 = vpack.c.b16 %v607, %v605
        %v714 = vpack.c.b16 %v610, %v608
        %v715 = vpack.c.b16 %v611, %v609
        %v716 = vpack.c.b16 %v614, %v612
        %v717 = vpack.c.b16 %v615, %v613
        %v718 = vpack.c.b16 %v618, %v616
        %v719 = vpack.c.b16 %v619, %v617
        %v720 = vpack.c.b16 %v622, %v620
        %v721 = vpack.c.b16 %v623, %v621
        %v722 = vpack.c.b16 %v626, %v624
        %v723 = vpack.c.b16 %v627, %v625
        %v724 = vpack.c.b16 %v630, %v628
        %v725 = vpack.c.b16 %v631, %v629
        %v726 = vpack.c.b16 %v634, %v632
        %v727 = vpack.c.b16 %v635, %v633
        %v728 = vpack.c.b16 %v638, %v636
        %v729 = vpack.c.b16 %v639, %v637
        %v730 = vpack.c.b16 %v642, %v640
        %v731 = vpack.c.b16 %v643, %v641
        %v732 = vpack.c.b16 %v646, %v644
        %v733 = vpack.c.b16 %v647, %v645
        %v734 = vpack.c.b16 %v650, %v648
        %v735 = vpack.c.b16 %v651, %v649
        %v736 = vpack.c.b16 %v654, %v652
        %v737 = vpack.c.b16 %v655, %v653
        %v738 = vpack.c.b16 %v658, %v656
        %v739 = vpack.c.b16 %v659, %v657
        %v740 = vpack.c.b16 %v662, %v660
        %v741 = vpack.c.b16 %v663, %v661
        %v742 = vpack.c.b16 %v666, %v664
        %v743 = vpack.c.b16 %v667, %v665
        %v744 = vpack.c.b16 %v670, %v668
        %v745 = vpack.c.b16 %v671, %v669
        %v746 = vpack.c.b16 %v674, %v672
        %v747 = vpack.c.b16 %v675, %v673
        %v748 = vpack.c.b16 %v678, %v676
        %v749 = vpack.c.b16 %v679, %v677
        %v750 = vpack.c.b16 %v682, %v680
        %v751 = vpack.c.b16 %v683, %v681
        %v752 = vpack.c.b16 %v686, %v684
        %v753 = vpack.c.b16 %v687, %v685
        %v754 = vpack.c.b16 %v690, %v688
        %v755 = vpack.c.b16 %v691, %v689
        %820 = vmatprep.subr.bf16.mxu0 %v693
        %821 = vmatpush1.bf16.msra.mxu0 %v692
        %822 = vmatprep.subr.bf16.mxu0 %v695
        %823 = vmatpush1.bf16.msra.mxu0 %v694
        %824 = vmatprep.subr.bf16.mxu0 %v697
        %825 = vmatpush1.bf16.msra.mxu0 %v696
        %826 = vmatprep.subr.bf16.mxu0 %v699
        %827 = vmatpush1.bf16.msra.mxu0 %v698
        %828 = vmatprep.subr.bf16.mxu0 %v701
        %829 = vmatpush1.bf16.msra.mxu0 %v700
        %830 = vmatprep.subr.bf16.mxu0 %v703
        %831 = vmatpush1.bf16.msra.mxu0 %v702
        %832 = vmatprep.subr.bf16.mxu0 %v705
        %833 = vmatpush1.bf16.msra.mxu0 %v704
        %834 = vmatprep.subr.bf16.mxu0 %v707
        %835 = vmatpush1.bf16.msra.mxu0 %v706
        %836 = vmatprep.subr.bf16.mxu0 %v709
        %837 = vmatpush1.bf16.msra.mxu0 %v708
        %838 = vmatprep.subr.bf16.mxu0 %v711
        %839 = vmatpush1.bf16.msra.mxu0 %v710
        %840 = vmatprep.subr.bf16.mxu0 %v713
        %841 = vmatpush1.bf16.msra.mxu0 %v712
        %842 = vmatprep.subr.bf16.mxu0 %v715
        %843 = vmatpush1.bf16.msra.mxu0 %v714
        %844 = vmatprep.subr.bf16.mxu0 %v717
        %845 = vmatpush1.bf16.msra.mxu0 %v716
        %846 = vmatprep.subr.bf16.mxu0 %v719
        %847 = vmatpush1.bf16.msra.mxu0 %v718
        %848 = vmatprep.subr.bf16.mxu0 %v721
        %849 = vmatpush1.bf16.msra.mxu0 %v720
        %850 = vmatprep.subr.bf16.mxu0 %v723
        %851 = vmatpush1.bf16.msra.mxu0 %v722
        %852 = vmatprep.mubr.bf16.mxu0 %v429
        %853 = vmatmul.mubr.bf16.gmra.mrb[0].mxu0 %v428
        %v854 = vpop.f32.mrb[0].mxu0
        %v855 = vadd.f32 0.0, %v854
        %v856 = vpop.f32.mrb[0].mxu0
        %v857 = vadd.f32 0.0, %v856
        %v858 = vpop.f32.mrb[0].mxu0
        %v859 = vadd.f32 0.0, %v858
        %v860 = vpop.f32.mrb[0].mxu0
        %v861 = vadd.f32 0.0, %v860
        %862 = vmatprep.mubr.bf16.mxu0 %v433
        %863 = vmatmul.mubr.bf16.gmra.mrb[0].mxu0 %v432
        %v864 = vpop.f32.mrb[0].mxu0
        %v865 = vadd.f32 0.0, %v864
        %v866 = vpop.f32.mrb[0].mxu0
        %v867 = vadd.f32 0.0, %v866
        %v868 = vpop.f32.mrb[0].mxu0
        %v869 = vadd.f32 0.0, %v868
        %v870 = vpop.f32.mrb[0].mxu0
        %v871 = vadd.f32 0.0, %v870
        %872 = vdwg.mxu0
        %873 = vmatprep.subr.bf16.mxu0 %v725
        %874 = vmatpush1.bf16.msra.mxu0 %v724
        %875 = vmatprep.subr.bf16.mxu0 %v727
        %876 = vmatpush1.bf16.msra.mxu0 %v726
        %877 = vmatprep.subr.bf16.mxu0 %v729
        %878 = vmatpush1.bf16.msra.mxu0 %v728
        %879 = vmatprep.subr.bf16.mxu0 %v731
        %880 = vmatpush1.bf16.msra.mxu0 %v730
        %881 = vmatprep.subr.bf16.mxu0 %v733
        %882 = vmatpush1.bf16.msra.mxu0 %v732
        %883 = vmatprep.subr.bf16.mxu0 %v735
        %884 = vmatpush1.bf16.msra.mxu0 %v734
        %885 = vmatprep.subr.bf16.mxu0 %v737
        %886 = vmatpush1.bf16.msra.mxu0 %v736
        %887 = vmatprep.subr.bf16.mxu0 %v739
        %888 = vmatpush1.bf16.msra.mxu0 %v738
        %889 = vmatprep.subr.bf16.mxu0 %v741
        %890 = vmatpush1.bf16.msra.mxu0 %v740
        %891 = vmatprep.subr.bf16.mxu0 %v743
        %892 = vmatpush1.bf16.msra.mxu0 %v742
        %893 = vmatprep.subr.bf16.mxu0 %v745
        %894 = vmatpush1.bf16.msra.mxu0 %v744
        %895 = vmatprep.subr.bf16.mxu0 %v747
        %896 = vmatpush1.bf16.msra.mxu0 %v746
        %897 = vmatprep.subr.bf16.mxu0 %v749
        %898 = vmatpush1.bf16.msra.mxu0 %v748
        %899 = vmatprep.subr.bf16.mxu0 %v751
        %900 = vmatpush1.bf16.msra.mxu0 %v750
        %901 = vmatprep.subr.bf16.mxu0 %v753
        %902 = vmatpush1.bf16.msra.mxu0 %v752
        %903 = vmatprep.subr.bf16.mxu0 %v755
        %904 = vmatpush1.bf16.msra.mxu0 %v754
        %905 = vmatprep.mubr.bf16.mxu0 %v431
        %906 = vmatmul.mubr.bf16.gmra.mrb[0].mxu0 %v430
        %v907 = vpop.f32.mrb[0].mxu0
        %v908 = vadd.f32 %v855, %v907
        %v909 = vpop.f32.mrb[0].mxu0
        %v910 = vadd.f32 %v857, %v909
        %v911 = vpop.f32.mrb[0].mxu0
        %v912 = vadd.f32 %v859, %v911
        %v913 = vpop.f32.mrb[0].mxu0
        %v914 = vadd.f32 %v861, %v913
        %915 = vmatprep.mubr.bf16.mxu0 %v435
        %916 = vmatmul.mubr.bf16.gmra.mrb[0].mxu0 %v434
        %v917 = vpop.f32.mrb[0].mxu0
        %v918 = vadd.f32 %v865, %v917
        %v919 = vpop.f32.mrb[0].mxu0
        %v920 = vadd.f32 %v867, %v919
        %v921 = vpop.f32.mrb[0].mxu0
        %v922 = vadd.f32 %v869, %v921
        %v923 = vpop.f32.mrb[0].mxu0
        %v924 = vadd.f32 %v871, %v923
        %925 = vdwg.mxu0
        %926 = vst [vmem:[%s217] sm:$0xff] %v908
        %927 = vst [vmem:[%s217 + $0x8] sm:$0xff] %v910
        %928 = vst [vmem:[%s217 + $0x10] sm:$0xff] %v912
        %929 = vst [vmem:[%s217 + $0x18] sm:$0xff] %v914
        %930 = vst [vmem:[%s217 + $0x20] sm:$0xff] %v918
        %931 = vst [vmem:[%s217 + $0x28] sm:$0xff] %v920
        %932 = vst [vmem:[%s217 + $0x30] sm:$0xff] %v922
        %933 = vst [vmem:[%s217 + $0x38] sm:$0xff] %v924
        %s934 = sand.u32 %s131, 1
        %s935 = scalar_lea.sflag [#allocation3], %s934
        %s936 = sand.u32 %s131, 1
        %s937 = smul.addr %s936, 64
        %s938 = scalar_lea.vmem [#allocation2], %s937
        // Predicated region
        $region37: #{_lambda_.1} parent=35 // pred_check
          %p939 = pneg %p141
        $region38: #{_lambda_.1} parent=35 // pred_check_branch
          %941 = sbr.rel (%p939) target = $region40
        $region39: #{_lambda_.1} parent=35 // pred_region
          %s942 = smul.u32 4, %s23
          %s944 = ssub.s32 1024, 1024
          %945 = vsyncadd %s935, %s944
          %s946 = smul.addr %s942, 2
          %s947 = smul.addr %s22, 16
          %s948 = sadd.s32 %s946, %s947
          %s949 = smul.addr %s948, 128
          %s950 = scalar_lea.hbm %s4, %s949
          %s951 = sshll.u32 %s938, 4
          %s952 = int_to_ptr.vmem [resolvable:$true] %s951
          %957 = dma.vmem_to_hbm [thread:$0]  %s952, 1024, %s950, %s935, 256, 256, 16
        $region40: #{_lambda_.1} parent=35 // pred_fallthru
          _
      $region36: #{_lambda_.1} parent=5 // pred_fallthru
        _
      %p958 = scmp.le.s32.totalorder 2, %s13
      // Predicated region
      $region41: #{_lambda_.1} parent=5 // pred_check
        %p959 = pneg %p958
      $region42: #{_lambda_.1} parent=5 // pred_check_branch
        %961 = sbr.rel (%p959) target = $region44
      $region43: #{_lambda_.1} parent=5 // pred_region
        %s962 = ssub.s32 %s13, 2
        // Predicated region
        $region45: #{_lambda_.1} parent=43 // pred_check
          %p963 = pneg %p147
        $region46: #{_lambda_.1} parent=43 // pred_check_branch
          %965 = sbr.rel (%p963) target = $region48
        $region47: #{_lambda_.1} parent=43 // pred_region
          %s966 = sand.u32 %s132, 1
          %s967 = scalar_lea.sflag [#allocation3], %s966
          %s968 = sand.u32 %s132, 1
          %s969 = smul.addr %s968, 64
          %s970 = scalar_lea.vmem [#allocation2], %s969
          %971 = dma.done %s967, 1024
        $region48: #{_lambda_.1} parent=43 // pred_fallthru
          _
      $region44: #{_lambda_.1} parent=5 // pred_fallthru
        _
    $region6: #{_lambda_.1} parent=1 // loop_footer
      %s17 = sadd.s32 1, %s13
    $region7: #{_lambda_.1} parent=1 // loop_footer_branch
      %12 = sbr.rel target = $region3
    $region8: #{_lambda_.1} parent=1 // loop_exit
      _
    %972 = vsyncpa [#allocation3], 1
    %s973 = scalar_lea.sflag [#allocation3], 1
    %974 = vsyncpa %s973, 1

</llo_original>
